<compile_context>
chip_gen: v6e
topology: v6e:2x2x1
jax: 0.10.0
libtpu: 0.0.40
codegen_flags: <defaults>
</compile_context>

<pallas_src>
import math

import jax
import jax.numpy as jnp
from jax.experimental import pallas as pl
from jax.experimental.pallas import tpu as pltpu


# ---------------------------------------------------------------------------
# Kernel (shared by both paths): one row tile of rows x full weight + pe tile.
# ---------------------------------------------------------------------------
def _data_embedding_kernel(x_ref, w_ref, pe_ref, o_ref):
    # x_ref:  (T, c_in)       streaming row tile
    # w_ref:  (c_in, d_model) VMEM-resident full weight
    # pe_ref: (T, d_model)    positional embedding with Linear bias folded in
    # o_ref:  (T, d_model)
    x = x_ref[...]
    w = w_ref[...]
    if w.dtype != x.dtype:
        # Opt-in reduced-precision staging: cast the x tile down in-kernel
        # (free VPU work) instead of paying an extra HBM pass in the wrapper.
        x = x.astype(w.dtype)
    acc = jnp.dot(x, w, preferred_element_type=jnp.float32)
    o_ref[...] = (acc + pe_ref[...].astype(jnp.float32)).astype(o_ref.dtype)


# ---------------------------------------------------------------------------
# Helpers
# ---------------------------------------------------------------------------
def _vmem_capacity_bytes():
    try:
        info = pltpu.get_tpu_info()
        cap = int(getattr(info, "vmem_capacity_bytes", 0))
        if cap > 0:
            return cap
    except Exception:
        pass
    return 64 * 1024 * 1024  # conservative: v7x per-TC VMEM


def _pick_tm(M, period, cap):
    """Largest multiple of `period` dividing M, <= cap; prefer >= 2 grid steps."""
    hi = min(M, cap)
    if period > hi:
        return None
    tms = [t for t in range(period, hi + 1, period) if M % t == 0]
    if not tms:
        return None
    two_plus = [t for t in tms if t <= M // 2]   # >=2 tiles -> both v7x TCs busy
    return max(two_plus) if two_plus else max(tms)


# ---------------------------------------------------------------------------
# Wrapper
# ---------------------------------------------------------------------------
def data_embedding(x, w, b, pe_full, *, tm_target=1024, staging_dtype=None,
                   out_dtype=jnp.float32):
    """x: (B, L, c_in), w: (c_in, d_model), b: (d_model,), pe_full: (max_len, d_model).

    Returns (B, L, d_model) in out_dtype.  staging_dtype=jnp.bfloat16 stages
    only W and pe (x stays untouched in HBM) and does a bf16 MXU matmul with
    f32 accumulation; out_dtype=jnp.bfloat16 halves output writeback.
    """
    B, L, c_in = x.shape
    d_model = w.shape[1]
    M = B * L
    if L > pe_full.shape[0]:
        raise ValueError(f"sequence length {L} exceeds positional table "
                         f"{pe_full.shape[0]}")

    # Fold the Linear bias into the positional rows (one fewer input stream).
    pe_b = pe_full[:L].astype(jnp.float32) + b.astype(jnp.float32)[None, :]

    # Stage only small / reused operands; never re-write x in HBM.
    w_in = w if staging_dtype is None else w.astype(staging_dtype)
    pe_dtype = jnp.float32 if staging_dtype is None else staging_dtype

    x_bytes = jnp.dtype(x.dtype).itemsize
    w_bytes = jnp.dtype(w_in.dtype).itemsize
    pe_bytes = jnp.dtype(pe_dtype).itemsize
    out_bytes = jnp.dtype(out_dtype).itemsize

    # 16-bit tiles pack 2 rows per sublane -> row tile must be a multiple of 16.
    sublane = 16 if min(x_bytes, pe_bytes, out_bytes) <= 2 else 8
    period = math.lcm(L, sublane)

    vmem_cap = _vmem_capacity_bytes()
    headroom = 16 * 1024 * 1024
    budget = max(vmem_cap - headroom, 8 * 1024 * 1024)

    # Per-row VMEM cost of double-buffered x / pe / out tiles + resident weight.
    row_cost = 2 * (c_in * x_bytes + d_model * pe_bytes + d_model * out_bytes)
    w_cost = 2 * c_in * d_model * w_bytes
    tm_vmem_cap = max((budget // 2 - w_cost) // max(row_cost, 1), period)
    tm_cap = int(min(tm_target, tm_vmem_cap))

    tm = _pick_tm(M, period, tm_cap)

    if tm is not None:
        # ---------------- Flat path: M = B*L row tiles, no padding ----------------
        x_flat = x.reshape(M, c_in)                       # free (contiguous)
        pe_tile = jnp.tile(pe_b, (tm // L, 1)).astype(pe_dtype)   # (tm, d_model)
        n_tiles = M // tm

        vmem_need = tm * row_cost + w_cost
        vmem_limit = int(min(max(2 * vmem_need, 32 << 20), budget))

        cost = pl.CostEstimate(
            flops=2 * M * c_in * d_model,
            transcendentals=0,
            bytes_accessed=(M * c_in * x_bytes
                            + c_in * d_model * w_bytes
                            + tm * d_model * pe_bytes
                            + M * d_model * out_bytes),
        )

        out_flat = pl.pallas_call(
            _data_embedding_kernel,
            out_shape=jax.ShapeDtypeStruct((M, d_model), out_dtype),
            grid_spec=pltpu.PrefetchScalarGridSpec(
                num_scalar_prefetch=0,
                grid=(n_tiles,),
                in_specs=[
                    pl.BlockSpec((tm, c_in), lambda mi: (mi, 0)),       # stream rows
                    pl.BlockSpec((c_in, d_model), lambda mi: (0, 0)),   # resident W
                    pl.BlockSpec((tm, d_model), lambda mi: (0, 0)),     # resident pe
                ],
                out_specs=pl.BlockSpec((tm, d_model), lambda mi: (mi, 0)),
            ),
            compiler_params=pltpu.CompilerParams(
                dimension_semantics=("parallel",),
                vmem_limit_bytes=vmem_limit,
            ),
            cost_estimate=cost,
        )(x_flat, w_in, pe_tile)
        return out_flat.reshape(B, L, d_model)

    # ---------------- Fallback: 2-D grid (L-block x batch), pe blocked by L ----
    # No (M, d_model) pe expansion; batch is the innermost grid axis so the pe
    # block is reused across it without re-DMA.
    tl = min(max((tm_cap // sublane) * sublane, sublane),
             ((L + sublane - 1) // sublane) * sublane)
    L_pad = ((L + tl - 1) // tl) * tl
    x_in = x if L_pad == L else jnp.pad(x, ((0, 0), (0, L_pad - L), (0, 0)))
    pe_in = (pe_b if L_pad == L
             else jnp.pad(pe_b, ((0, L_pad - L), (0, 0)))).astype(pe_dtype)
    n_l = L_pad // tl

    vmem_need = tl * row_cost + w_cost
    vmem_limit = int(min(max(2 * vmem_need, 32 << 20), budget))

    cost = pl.CostEstimate(
        flops=2 * B * L_pad * c_in * d_model,
        transcendentals=0,
        bytes_accessed=(B * L_pad * c_in * x_bytes
                        + c_in * d_model * w_bytes
                        + L_pad * d_model * pe_bytes
                        + B * L_pad * d_model * out_bytes),
    )

    out = pl.pallas_call(
        _data_embedding_kernel,
        out_shape=jax.ShapeDtypeStruct((B, L_pad, d_model), out_dtype),
        grid_spec=pltpu.PrefetchScalarGridSpec(
            num_scalar_prefetch=0,
            grid=(n_l, B),                                  # batch innermost
            in_specs=[
                pl.BlockSpec((pl.Squeezed(), tl, c_in),
                             lambda lj, bi: (bi, lj, 0)),
                pl.BlockSpec((c_in, d_model), lambda lj, bi: (0, 0)),
                pl.BlockSpec((tl, d_model), lambda lj, bi: (lj, 0)),
            ],
            out_specs=pl.BlockSpec((pl.Squeezed(), tl, d_model),
                                   lambda lj, bi: (bi, lj, 0)),
        ),
        compiler_params=pltpu.CompilerParams(
            dimension_semantics=("parallel", "parallel"),
            vmem_limit_bytes=vmem_limit,
        ),
        cost_estimate=cost,
    )(x_in, w_in, pe_in)
    return out[:, :L, :]


# ---------------------------------------------------------------------------
# Parameter / buffer construction (deterministic, in-script)
# ---------------------------------------------------------------------------
def make_positional_embedding(max_len, d_model):
    position = jnp.arange(0, max_len, dtype=jnp.float32)[:, None]
    div_term = jnp.exp(
        jnp.arange(0, d_model, 2, dtype=jnp.float32)
        * (-(math.log(10000.0) / d_model))
    )
    ang = position * div_term
    pe = jnp.zeros((max_len, d_model), dtype=jnp.float32)
    pe = pe.at[:, 0::2].set(jnp.sin(ang))
    pe = pe.at[:, 1::2].set(jnp.cos(ang))
    return pe


def make_linear_params(key, c_in, d_model):
    # Mimic nn.Linear default init: U(-1/sqrt(fan_in), 1/sqrt(fan_in))
    kw, kb = jax.random.split(key)
    bound = 1.0 / math.sqrt(c_in)
    w = jax.random.uniform(kw, (c_in, d_model), jnp.float32, -bound, bound)
    b = jax.random.uniform(kb, (d_model,), jnp.float32, -bound, bound)
    return w, b


# ---------------------------------------------------------------------------
# Pure-JAX reference
# ---------------------------------------------------------------------------
def reference(x, w, b, pe_full):
    B, L, _ = x.shape
    return x @ w + b[None, None, :] + pe_full[None, :L, :]


if __name__ == "__main__":
    key = jax.random.PRNGKey(0)
    kx, kp, kx2 = jax.random.split(key, 3)

    # Small shapes consistent with the module: (B, L, c_in) -> (B, L, d_model)
    B, L, c_in, d_model = 2, 8, 64, 128
    max_len = 1000

    x = jax.random.normal(kx, (B, L, c_in), jnp.float32)
    w, b = make_linear_params(kp, c_in, d_model)
    pe_full = make_positional_embedding(max_len, d_model)
    ref = reference(x, w, b, pe_full)

    # 1) f32 path (exact semantics of the PyTorch module, dropout = identity).
    out = data_embedding(x, w, b, pe_full)
    jax.block_until_ready(out)
    assert out.shape == (B, L, d_model)
    assert jnp.allclose(out, ref, atol=1e-4, rtol=1e-4), "f32 mismatch vs reference"

    # 2) bandwidth-saver path: bf16-staged W/pe + bf16 output (f32 accumulate).
    out_bf = data_embedding(x, w, b, pe_full,
                            staging_dtype=jnp.bfloat16, out_dtype=jnp.bfloat16)
    jax.block_until_ready(out_bf)
    assert out_bf.dtype == jnp.bfloat16
    assert jnp.allclose(out_bf.astype(jnp.float32), ref, atol=5e-2, rtol=5e-2), \
        "bf16 mismatch vs reference"

    # 3) Unaligned shape exercising the 2-D-grid fallback (no flat divisor).
    B2, L2 = 3, 6
    x2 = jax.random.normal(kx2, (B2, L2, c_in), jnp.float32)
    ref2 = reference(x2, w, b, pe_full)
    out2 = data_embedding(x2, w, b, pe_full)
    jax.block_until_ready(out2)
    assert out2.shape == (B2, L2, d_model)
    assert jnp.allclose(out2, ref2, atol=1e-4, rtol=1e-4), "fallback mismatch"

    print("KERNEL_OK")
</pallas_src>

<mosaic_0001>
module attributes {stable_mosaic.version = 11 : i64} {
  func.func @_data_embedding_kernel(%arg0: i32, %arg1: memref<8x64xf32, #tpu.memory_space<vmem>>, %arg2: memref<64x128xf32, #tpu.memory_space<vmem>>, %arg3: memref<8x128xf32, #tpu.memory_space<vmem>>, %arg4: memref<8x128xf32, #tpu.memory_space<vmem>>) attributes {dimension_semantics = [#tpu.dimension_semantics<parallel>], iteration_bounds = array<i64: 2>, scalar_prefetch = 0 : i64, scratch_operands = 0 : i64, tpu.core_type = #tpu.core_type<tc>, window_params = [{transform_indices = @transform_0, window_bounds = array<i64: 8, 64>}, {pipeline_mode = #tpu.pipeline_mode<synchronous>, transform_indices = @transform_1, window_bounds = array<i64: 64, 128>}, {pipeline_mode = #tpu.pipeline_mode<synchronous>, transform_indices = @transform_2, window_bounds = array<i64: 8, 128>}, {transform_indices = @transform_3, window_bounds = array<i64: 8, 128>}]} {
    %c0 = arith.constant 0 : index
    %c0_0 = arith.constant 0 : index
    %0 = vector.load %arg1[%c0, %c0_0] : memref<8x64xf32, #tpu.memory_space<vmem>>, vector<8x64xf32>
    %c0_1 = arith.constant 0 : index
    %c0_2 = arith.constant 0 : index
    %1 = vector.load %arg2[%c0_1, %c0_2] : memref<64x128xf32, #tpu.memory_space<vmem>>, vector<64x128xf32>
    %cst = arith.constant dense<0.000000e+00> : vector<8x128xf32>
    %2 = tpu.matmul %0, %1, %cst {dimension_numbers = #tpu.dot_dimension_numbers<[1], [0], [0], [1], [0, 0, 1, 1], [], []>} : vector<8x64xf32>, vector<64x128xf32>, vector<8x128xf32> -> vector<8x128xf32>
    %c0_3 = arith.constant 0 : index
    %c0_4 = arith.constant 0 : index
    %3 = vector.load %arg3[%c0_3, %c0_4] : memref<8x128xf32, #tpu.memory_space<vmem>>, vector<8x128xf32>
    %4 = arith.addf %2, %3 : vector<8x128xf32>
    %c0_5 = arith.constant 0 : index
    %c0_6 = arith.constant 0 : index
    %5 = vector.load %arg4[%c0_5, %c0_6] : memref<8x128xf32, #tpu.memory_space<vmem>>, vector<8x128xf32>
    tpu.vector_store %arg4[%c0_5, %c0_6], %4 {strides = array<i32>} : memref<8x128xf32, #tpu.memory_space<vmem>>, vector<8x128xf32>,
    return
  }
  func.func @transform_0(%arg0: i32) -> (i32, i32) {
    %c0_i32 = arith.constant 0 : i32
    %c0_i32_0 = arith.constant 0 : i32
    return %arg0, %c0_i32 : i32, i32
  }
  func.func @transform_1(%arg0: i32) -> (i32, i32) {
    %c0_i32 = arith.constant 0 : i32
    %c0_i32_0 = arith.constant 0 : i32
    %c0_i32_1 = arith.constant 0 : i32
    return %c0_i32, %c0_i32_0 : i32, i32
  }
  func.func @transform_2(%arg0: i32) -> (i32, i32) {
    %c0_i32 = arith.constant 0 : i32
    %c0_i32_0 = arith.constant 0 : i32
    %c0_i32_1 = arith.constant 0 : i32
    return %c0_i32, %c0_i32_0 : i32, i32
  }
  func.func @transform_3(%arg0: i32) -> (i32, i32) {
    %c0_i32 = arith.constant 0 : i32
    %c0_i32_0 = arith.constant 0 : i32
    return %arg0, %c0_i32 : i32, i32
  }
}

</mosaic_0001>

<llo_original>
// kernel: tpu_custom_call.1
$region0: #{tpu_custom_call.1}
  #allocation0 [shape = 'u32[]', space=smem, size = 0x4, offset = 0x4, fixed_abs, tag = 'smem constant byte address 0x4 - core index']
  #allocation1 [shape = 'u32[144,128]{1,0:T(1,128)}', space=vmem, size = 0x12000, scoped, tag = 'internal scratch']
  %s0 = inlined_call_operand.hbm [shape: f32[16,64], index: 0, kind: input, shape index: {}]
  %s1 = inlined_call_operand.hbm [shape: f32[64,128], index: 1, kind: input, shape index: {}]
  %s2 = inlined_call_operand.hbm [shape: f32[8,128], index: 2, kind: input, shape index: {}]
  %s3 = inlined_call_operand.hbm [shape: f32[16,128], index: 3, kind: output, shape index: {}]
  %s4 = sld [smem:[#allocation0]]
  $region57: #{tpu_custom_call.1} parent=0
    _
  %s6 = ssub.s32 1, %s4
  %s7 = scalar_select 0, %s6, %s4
  $region1: #{tpu_custom_call.1} parent=0
    #allocation2 [shape = 'u8[8192]{0}', space=vmem, size = 0x2000, scoped, tag = 'input window, operand 0']
    #allocation3 [shape = 's32[2]{0}', space=sflag, size = 0x8, scoped, tag = 'scoped memory for tpu_custom_call.1']
    #allocation4 [shape = 's32[2]{0}', space=sflag, size = 0x8, scoped, tag = 'scoped memory for tpu_custom_call.1']
    #allocation5 [shape = 'u8[32768]{0}', space=vmem, size = 0x8000, scoped, tag = 'input window, operand 1, single buffered']
    #allocation6 [shape = 's32[1]{0}', space=sflag, size = 0x4, scoped, tag = 'scoped memory for tpu_custom_call.1']
    #allocation7 [shape = 'u8[4096]{0}', space=vmem, size = 0x1000, scoped, tag = 'input window, operand 2, single buffered']
    #allocation8 [shape = 'u8[8192]{0}', space=vmem, size = 0x2000, scoped, tag = 'output window, operand 0']
    %8 = vsyncpa [#allocation3], 0
    %s9 = scalar_lea.sflag [#allocation3], 1
    %10 = vsyncpa %s9, 0
    %11 = vsyncpa [#allocation6], 0
    %12 = vsyncpa [#allocation4], 0
    %s13 = scalar_lea.sflag [#allocation4], 1
    %14 = vsyncpa %s13, 0
    loop: start=0, step=1, limit=4
    $region2: #{tpu_custom_call.1} parent=1 // loop_pre_header
      _
    $region3: #{tpu_custom_call.1} parent=1 // loop_header
      %s16 = sphi 0, %s20
      %p17 = scmp.ge.s32.totalorder %s16, 4
      %s26 = sphi 0, %s28
      %s29 = sphi 0, %s26
      %s30 = sphi 0, %s29
      %s46 = sphi 0, %s30
      %s50 = sphi 0, %s50
      %s52 = sphi 0, %s50
      %s53 = sphi 0, %s52
      %s67 = sphi 0, %s53
      %s71 = sphi 0, %s71
      %s73 = sphi 0, %s71
      %s74 = sphi 0, %s73
      %s88 = sphi 0, %s74
      %s94 = sphi 0, %s96
      %s97 = sphi 0, %s94
      %s98 = sphi 0, %s97
      %s114 = sphi 0, %s98
    $region4: #{tpu_custom_call.1} parent=1 // loop_header_branch
      %19 = sbr.rel (%p17) target = $region8
    $region5: #{tpu_custom_call.1} parent=1 // loop_body
      %s21 = ssub.s32 %s16, 1
      %s22 = ssub.s32 %s16, 2
      %s23 = sadd.s32 %s16, 1
      %s24 = ssub.s32 %s16, %s23
      %p25 = scmp.eq.s32.totalorder %s24, 0
      %s27 = sadd.s32 %s26, 1
      %s28 = scalar_select %p25, %s26, %s27
      %p31 = pneg %p25
      %p32 = scmp.eq.s32.totalorder %s16, 1
      %p33 = por %p31, %p32
      %p34 = scmp.ne.s32.totalorder %s26, %s29
      %p35 = scmp.eq.s32.totalorder %s16, 0
      %p36 = por %p34, %p35
      %p37 = scmp.ne.s32.totalorder %s26, %s29
      %p38 = scmp.eq.s32.totalorder %s21, 1
      %p39 = por %p37, %p38
      %p40 = scmp.ne.s32.totalorder %s29, %s30
      %p41 = scmp.eq.s32.totalorder %s21, 0
      %p42 = por %p40, %p41
      %p43 = scmp.ne.s32.totalorder %s29, %s30
      %p44 = scmp.eq.s32.totalorder %s22, 1
      %p45 = por %p43, %p44
      %p47 = scmp.ne.s32.totalorder %s30, %s46
      %p48 = scmp.eq.s32.totalorder %s22, 0
      %p49 = por %p47, %p48
      %s51 = sadd.s32 %s50, 1
      %p54 = scmp.eq.s32.totalorder %s16, 1
      %p55 = scmp.ne.s32.totalorder %s50, %s52
      %p56 = scmp.eq.s32.totalorder %s16, 0
      %p57 = por %p55, %p56
      %p58 = scmp.ne.s32.totalorder %s50, %s52
      %p59 = scmp.eq.s32.totalorder %s21, 1
      %p60 = por %p58, %p59
      %p61 = scmp.ne.s32.totalorder %s52, %s53
      %p62 = scmp.eq.s32.totalorder %s21, 0
      %p63 = por %p61, %p62
      %p64 = scmp.ne.s32.totalorder %s52, %s53
      %p65 = scmp.eq.s32.totalorder %s22, 1
      %p66 = por %p64, %p65
      %p68 = scmp.ne.s32.totalorder %s53, %s67
      %p69 = scmp.eq.s32.totalorder %s22, 0
      %p70 = por %p68, %p69
      %s72 = sadd.s32 %s71, 1
      %p75 = scmp.eq.s32.totalorder %s16, 1
      %p76 = scmp.ne.s32.totalorder %s71, %s73
      %p77 = scmp.eq.s32.totalorder %s16, 0
      %p78 = por %p76, %p77
      %p79 = scmp.ne.s32.totalorder %s71, %s73
      %p80 = scmp.eq.s32.totalorder %s21, 1
      %p81 = por %p79, %p80
      %p82 = scmp.ne.s32.totalorder %s73, %s74
      %p83 = scmp.eq.s32.totalorder %s21, 0
      %p84 = por %p82, %p83
      %p85 = scmp.ne.s32.totalorder %s73, %s74
      %p86 = scmp.eq.s32.totalorder %s22, 1
      %p87 = por %p85, %p86
      %p89 = scmp.ne.s32.totalorder %s74, %s88
      %p90 = scmp.eq.s32.totalorder %s22, 0
      %p91 = por %p89, %p90
      %s92 = ssub.s32 %s16, %s23
      %p93 = scmp.eq.s32.totalorder %s92, 0
      %s95 = sadd.s32 %s94, 1
      %s96 = scalar_select %p93, %s94, %s95
      %p99 = pneg %p93
      %p100 = scmp.eq.s32.totalorder %s16, 1
      %p101 = por %p99, %p100
      %p102 = scmp.ne.s32.totalorder %s94, %s97
      %p103 = scmp.eq.s32.totalorder %s16, 0
      %p104 = por %p102, %p103
      %p105 = scmp.ne.s32.totalorder %s94, %s97
      %p106 = scmp.eq.s32.totalorder %s21, 1
      %p107 = por %p105, %p106
      %p108 = scmp.ne.s32.totalorder %s97, %s98
      %p109 = scmp.eq.s32.totalorder %s21, 0
      %p110 = por %p108, %p109
      %p111 = scmp.ne.s32.totalorder %s97, %s98
      %p112 = scmp.eq.s32.totalorder %s22, 1
      %p113 = por %p111, %p112
      %p115 = scmp.ne.s32.totalorder %s98, %s114
      %p116 = scmp.eq.s32.totalorder %s22, 0
      %p117 = por %p115, %p116
      %p118 = scmp.le.s32.totalorder 1, %s16
      %p119 = scmp.lt.s32.totalorder %s16, 3
      %p120 = pnand %p118, %p119
      %p121 = pneg %p120
      // Predicated region
      $region9: #{tpu_custom_call.1} parent=5 // pred_check
        _
      $region10: #{tpu_custom_call.1} parent=5 // pred_check_branch
        %123 = sbr.rel (%p120) target = $region12
      $region11: #{tpu_custom_call.1} parent=5 // pred_region
        %s124 = ssub.s32 %s16, 1
        // Predicated region
        $region13: #{tpu_custom_call.1} parent=11 // pred_check
          %p125 = pneg %p63
        $region14: #{tpu_custom_call.1} parent=11 // pred_check_branch
          %127 = sbr.rel (%p125) target = $region16
        $region15: #{tpu_custom_call.1} parent=11 // pred_region
          %s129 = ssub.s32 1024, 1024
          %130 = vsyncadd [#allocation6], %s129
          %s131 = sshll.u32 [#allocation5], 4
          %s132 = int_to_ptr.vmem [resolvable:$true] %s131
          %137 = dma.hbm_to_vmem [thread:$0]  %s1, 1024, %s132, [#allocation6], 128, 128, 8
        $region16: #{tpu_custom_call.1} parent=11 // pred_fallthru
          _
        // Predicated region
        $region17: #{tpu_custom_call.1} parent=11 // pred_check
          %p138 = pneg %p84
        $region18: #{tpu_custom_call.1} parent=11 // pred_check_branch
          %140 = sbr.rel (%p138) target = $region20
        $region19: #{tpu_custom_call.1} parent=11 // pred_region
          %s142 = ssub.s32 128, 128
          %143 = vsyncadd [#allocation6], %s142
          %s145 = sshll.u32 [#allocation7], 4
          %s146 = int_to_ptr.vmem [resolvable:$true] %s145
          %148 = dma.hbm_to_vmem [thread:$0]  %s2, 128, %s146, [#allocation6]
        $region20: #{tpu_custom_call.1} parent=11 // pred_fallthru
          _
      $region12: #{tpu_custom_call.1} parent=5 // pred_fallthru
        _
      %p149 = scmp.lt.s32.totalorder %s16, 2
      // Predicated region
      $region21: #{tpu_custom_call.1} parent=5 // pred_check
        %p150 = pneg %p149
      $region22: #{tpu_custom_call.1} parent=5 // pred_check_branch
        %152 = sbr.rel (%p150) target = $region24
      $region23: #{tpu_custom_call.1} parent=5 // pred_region
        // Predicated region
        $region25: #{tpu_custom_call.1} parent=23 // pred_check
          %p153 = pneg %p36
        $region26: #{tpu_custom_call.1} parent=23 // pred_check_branch
          %155 = sbr.rel (%p153) target = $region28
        $region27: #{tpu_custom_call.1} parent=23 // pred_region
          %s156 = sand.u32 %s26, 1
          %s157 = scalar_lea.sflag [#allocation3], %s156
          %s158 = sand.u32 %s26, 1
          %s159 = smul.addr %s158, 8
          %s160 = scalar_lea.vmem [#allocation2], %s159
          %s162 = ssub.s32 128, 128
          %163 = vsyncadd %s157, %s162
          %s164 = smul.addr %s16, 128
          %s165 = scalar_lea.hbm %s0, %s164
          %s167 = sshll.u32 %s160, 4
          %s168 = int_to_ptr.vmem [resolvable:$true] %s167
          %170 = dma.hbm_to_vmem [thread:$0]  %s165, 128, %s168, %s157
        $region28: #{tpu_custom_call.1} parent=23 // pred_fallthru
          _
      $region24: #{tpu_custom_call.1} parent=5 // pred_fallthru
        _
      %p171 = scmp.le.s32.totalorder 1, %s16
      %p172 = scmp.lt.s32.totalorder %s16, 3
      %p173 = pnand %p171, %p172
      %p174 = pneg %p173
      // Predicated region
      $region29: #{tpu_custom_call.1} parent=5 // pred_check
        _
      $region30: #{tpu_custom_call.1} parent=5 // pred_check_branch
        %176 = sbr.rel (%p173) target = $region32
      $region31: #{tpu_custom_call.1} parent=5 // pred_region
        %s177 = ssub.s32 %s16, 1
        %s178 = sand.u32 %s29, 1
        %s179 = scalar_lea.sflag [#allocation3], %s178
        %s180 = sand.u32 %s29, 1
        %s181 = smul.addr %s180, 8
        %s182 = scalar_lea.vmem [#allocation2], %s181
        // Predicated region
        $region33: #{tpu_custom_call.1} parent=31 // pred_check
          %p183 = pneg %p42
        $region34: #{tpu_custom_call.1} parent=31 // pred_check_branch
          %185 = sbr.rel (%p183) target = $region36
        $region35: #{tpu_custom_call.1} parent=31 // pred_region
          %186 = dma.done %s179, 128
        $region36: #{tpu_custom_call.1} parent=31 // pred_fallthru
          _
        // Predicated region
        $region37: #{tpu_custom_call.1} parent=31 // pred_check
          %p187 = pneg %p63
        $region38: #{tpu_custom_call.1} parent=31 // pred_check_branch
          %189 = sbr.rel (%p187) target = $region40
        $region39: #{tpu_custom_call.1} parent=31 // pred_region
          %190 = dma.done [#allocation6], 1024
        $region40: #{tpu_custom_call.1} parent=31 // pred_fallthru
          _
        // Predicated region
        $region41: #{tpu_custom_call.1} parent=31 // pred_check
          %p191 = pneg %p84
        $region42: #{tpu_custom_call.1} parent=31 // pred_check_branch
          %193 = sbr.rel (%p191) target = $region44
        $region43: #{tpu_custom_call.1} parent=31 // pred_region
          %194 = dma.done [#allocation6], 128
        $region44: #{tpu_custom_call.1} parent=31 // pred_fallthru
          _
        %s195 = sand.u32 %s29, 1
        %s196 = scalar_lea.sflag [#allocation3], %s195
        %s197 = sand.u32 %s29, 1
        %s198 = smul.addr %s197, 8
        %s199 = scalar_lea.vmem [#allocation2], %s198
        %p200 = pneg %p42
        %p201 = pneg %p39
        %p202 = pneg %p63
        %p203 = pneg %p60
        %p204 = pneg %p84
        %p205 = pneg %p81
        %p206 = pneg %p110
        %p207 = pneg %p107
        %s208 = sand.u32 %s97, 1
        %s209 = scalar_lea.sflag [#allocation4], %s208
        %s210 = sand.u32 %s97, 1
        %s211 = smul.addr %s210, 8
        %s212 = scalar_lea.vmem [#allocation8], %s211
        %v213 = vld [vmem:[%s182] sm:$0xff]
        %v214 = vld [vmem:[#allocation5] sm:$0xff]
        %v215 = vld [vmem:[#allocation5 + $0x8] sm:$0xff]
        %v216 = vld [vmem:[#allocation5 + $0x10] sm:$0xff]
        %v217 = vld [vmem:[#allocation5 + $0x18] sm:$0xff]
        %v218 = vld [vmem:[#allocation5 + $0x20] sm:$0xff]
        %v219 = vld [vmem:[#allocation5 + $0x28] sm:$0xff]
        %v220 = vld [vmem:[#allocation5 + $0x30] sm:$0xff]
        %v221 = vld [vmem:[#allocation5 + $0x38] sm:$0xff]
        %v222 = vld [vmem:[#allocation7] sm:$0xff]
        %vm223 = vcmask 523264
        %v225 = vsel %vm223, %v213, 0
        %227 = vmatprep.subr.mxu0 0.0
        %228 = vmatpush1.msra.mxu0 0.0
        %229 = vmatprep.subr.mxu0 0.0
        %230 = vmatpush1.msra.mxu0 0.0
        %231 = vmatprep.subr.mxu0 0.0
        %232 = vmatpush1.msra.mxu0 0.0
        %233 = vmatprep.subr.mxu0 0.0
        %234 = vmatpush1.msra.mxu0 0.0
        %235 = vmatprep.subr.mxu0 0.0
        %236 = vmatpush1.msra.mxu0 0.0
        %237 = vmatprep.subr.mxu0 0.0
        %238 = vmatpush1.msra.mxu0 0.0
        %239 = vmatprep.subr.mxu0 0.0
        %240 = vmatpush1.msra.mxu0 0.0
        %241 = vmatprep.subr.mxu0 0.0
        %242 = vmatpush1.msra.mxu0 0.0
        %243 = vmatprep.subr.mxu0 0.0
        %244 = vmatpush1.msra.mxu0 %v221
        %245 = vmatprep.subr.mxu0 0.0
        %246 = vmatpush1.msra.mxu0 %v220
        %247 = vmatprep.subr.mxu0 0.0
        %248 = vmatpush1.msra.mxu0 %v219
        %249 = vmatprep.subr.mxu0 0.0
        %250 = vmatpush1.msra.mxu0 %v218
        %251 = vmatprep.subr.mxu0 0.0
        %252 = vmatpush1.msra.mxu0 %v217
        %253 = vmatprep.subr.mxu0 0.0
        %254 = vmatpush1.msra.mxu0 %v216
        %255 = vmatprep.subr.mxu0 0.0
        %256 = vmatpush1.msra.mxu0 %v215
        %257 = vmatprep.subr.mxu0 0.0
        %258 = vmatpush1.msra.mxu0 %v214
        %259 = vmatprep.subr.mxu0 0.0
        %260 = vmatpush2.msra.mxu0 0.0
        %261 = vmatprep.subr.mxu0 0.0
        %262 = vmatpush2.msra.mxu0 0.0
        %263 = vmatprep.subr.mxu0 0.0
        %264 = vmatpush2.msra.mxu0 0.0
        %265 = vmatprep.subr.mxu0 0.0
        %266 = vmatpush2.msra.mxu0 0.0
        %267 = vmatprep.subr.mxu0 0.0
        %268 = vmatpush2.msra.mxu0 0.0
        %269 = vmatprep.subr.mxu0 0.0
        %270 = vmatpush2.msra.mxu0 0.0
        %271 = vmatprep.subr.mxu0 0.0
        %272 = vmatpush2.msra.mxu0 0.0
        %273 = vmatprep.subr.mxu0 0.0
        %274 = vmatpush2.msra.mxu0 0.0
        %275 = vmatprep.subr.mxu0 0.0
        %276 = vmatpush2.msra.mxu0 0.0
        %277 = vmatprep.subr.mxu0 0.0
        %278 = vmatpush2.msra.mxu0 0.0
        %279 = vmatprep.subr.mxu0 0.0
        %280 = vmatpush2.msra.mxu0 0.0
        %281 = vmatprep.subr.mxu0 0.0
        %282 = vmatpush2.msra.mxu0 0.0
        %283 = vmatprep.subr.mxu0 0.0
        %284 = vmatpush2.msra.mxu0 0.0
        %285 = vmatprep.subr.mxu0 0.0
        %286 = vmatpush2.msra.mxu0 0.0
        %287 = vmatprep.subr.mxu0 0.0
        %288 = vmatpush2.msra.mxu0 0.0
        %289 = vmatprep.subr.mxu0 0.0
        %290 = vmatpush2.msra.mxu0 0.0
        %291 = vmatprep.mubr.f32.mxu0 0.0
        %292 = vmatmul.mubr.f32.gmra.mxu0 %v225
        %v293 = vpop.f32.mrf.mxu0
        %v294 = vadd.f32 %v222, %v293
        %v295 = vpop.f32.mrf.mxu0
        %296 = vdwg.mxu0
        %297 = vst [vmem:[%s212] sm:$0xff] %v294
        %s298 = sand.u32 %s97, 1
        %s299 = scalar_lea.sflag [#allocation4], %s298
        %s300 = sand.u32 %s97, 1
        %s301 = smul.addr %s300, 8
        %s302 = scalar_lea.vmem [#allocation8], %s301
        // Predicated region
        $region45: #{tpu_custom_call.1} parent=31 // pred_check
          %p303 = pneg %p107
        $region46: #{tpu_custom_call.1} parent=31 // pred_check_branch
          %305 = sbr.rel (%p303) target = $region48
        $region47: #{tpu_custom_call.1} parent=31 // pred_region
          %s307 = ssub.s32 128, 128
          %308 = vsyncadd %s299, %s307
          %s309 = smul.addr %s21, 128
          %s310 = scalar_lea.hbm %s3, %s309
          %s312 = sshll.u32 %s302, 4
          %s313 = int_to_ptr.vmem [resolvable:$true] %s312
          %315 = dma.vmem_to_hbm [thread:$0]  %s313, 128, %s310, %s299
        $region48: #{tpu_custom_call.1} parent=31 // pred_fallthru
          _
      $region32: #{tpu_custom_call.1} parent=5 // pred_fallthru
        _
      %p316 = scmp.le.s32.totalorder 2, %s16
      // Predicated region
      $region49: #{tpu_custom_call.1} parent=5 // pred_check
        %p317 = pneg %p316
      $region50: #{tpu_custom_call.1} parent=5 // pred_check_branch
        %319 = sbr.rel (%p317) target = $region52
      $region51: #{tpu_custom_call.1} parent=5 // pred_region
        %s320 = ssub.s32 %s16, 2
        // Predicated region
        $region53: #{tpu_custom_call.1} parent=51 // pred_check
          %p321 = pneg %p113
        $region54: #{tpu_custom_call.1} parent=51 // pred_check_branch
          %323 = sbr.rel (%p321) target = $region56
        $region55: #{tpu_custom_call.1} parent=51 // pred_region
          %s324 = sand.u32 %s98, 1
          %s325 = scalar_lea.sflag [#allocation4], %s324
          %s326 = sand.u32 %s98, 1
          %s327 = smul.addr %s326, 8
          %s328 = scalar_lea.vmem [#allocation8], %s327
          %329 = dma.done %s325, 128
        $region56: #{tpu_custom_call.1} parent=51 // pred_fallthru
          _
      $region52: #{tpu_custom_call.1} parent=5 // pred_fallthru
        _
    $region6: #{tpu_custom_call.1} parent=1 // loop_footer
      %s20 = sadd.s32 1, %s16
    $region7: #{tpu_custom_call.1} parent=1 // loop_footer_branch
      %15 = sbr.rel target = $region3
    $region8: #{tpu_custom_call.1} parent=1 // loop_exit
      _
    %330 = vsyncpa [#allocation3], 1
    %s331 = scalar_lea.sflag [#allocation3], 1
    %332 = vsyncpa %s331, 1
    %333 = vsyncpa [#allocation6], 1
    %334 = vsyncpa [#allocation4], 1
    %s335 = scalar_lea.sflag [#allocation4], 1
    %336 = vsyncpa %s335, 1

</llo_original>
